<compile_context>
chip_gen: v6e
topology: v6e:2x2x1
jax: 0.10.0
libtpu: 0.0.40
codegen_flags: <defaults>
</compile_context>

<pallas_src>
import jax
import jax.numpy as jnp
from jax import lax
from jax.experimental import pallas as pl
from jax.experimental.pallas import tpu as pltpu


_LANE = 128
_SUBLANE = 8
_MAX_TK = 2048                      # lane-dense tile cap along the H*W axis
_VMEM_INPUT_BUDGET = 12 * 1024 * 1024   # bytes for double-buffered input tiles
_VMEM_LIMIT_BYTES = 48 * 1024 * 1024    # safe on v5e/v6e (128 MiB) and v7x (64 MiB)

_CONTENT_LEVEL = 2
_STYLE_WEIGHT = 10000000.0

# contract last dim of lhs with last dim of rhs (i.e. F @ F^T without a transpose)
_DN_LAST = (((1,), (1,)), ((), ()))


# ----------------------------------------------------------------------------
# shape helpers (plain-JAX glue)
# ----------------------------------------------------------------------------
def _round_up(x, m):
    return ((x + m - 1) // m) * m


def _flat2d(t):
    a, b, c, d = t.shape
    return t.reshape(a * b, c * d)


def _pad2d(f, m_pad, k_pad):
    m, k = f.shape
    if m == m_pad and k == k_pad:
        return f
    return jnp.pad(f, ((0, m_pad - m), (0, k_pad - k)))


def _choose_k_tiling(m_pad, k, itemsize, n_streams):
    """Pick a K-tile (multiple of 128) so double-buffered input tiles fit VMEM."""
    k128 = _round_up(k, _LANE)
    bytes_per_col = 2 * n_streams * m_pad * itemsize       # double-buffered inputs
    tk_cap = (_VMEM_INPUT_BUDGET // max(bytes_per_col, 1)) // _LANE * _LANE
    tk = max(_LANE, min(k128, _MAX_TK, tk_cap))
    k_pad = _round_up(k, tk)
    return tk, k_pad


def _compiler_params():
    return pltpu.CompilerParams(
        dimension_semantics=("arbitrary",),          # grid axis is a reduction
        vmem_limit_bytes=_VMEM_LIMIT_BYTES,
    )


def _scalar_smem_out_spec():
    return pl.BlockSpec((1, 1), lambda k: (0, 0), memory_space=pltpu.MemorySpace.SMEM)


# ----------------------------------------------------------------------------
# Kernel 1: raw gram-difference squared sum, K-tiled.
#   accumulates Gx = X X^T, Gy = Y Y^T in resident f32 scratch,
#   emits sum((Gx - Gy)^2) (un-normalized).
# ----------------------------------------------------------------------------
def _gram_sq_kernel(x_ref, y_ref, out_ref, gx_ref, gy_ref):
    k = pl.program_id(0)

    @pl.when(k == 0)
    def _init():
        gx_ref[...] = jnp.zeros_like(gx_ref)
        gy_ref[...] = jnp.zeros_like(gy_ref)

    x = x_ref[...]
    y = y_ref[...]
    gx_ref[...] += lax.dot_general(x, x, _DN_LAST, preferred_element_type=jnp.float32)
    gy_ref[...] += lax.dot_general(y, y, _DN_LAST, preferred_element_type=jnp.float32)

    @pl.when(k == pl.num_programs(0) - 1)
    def _finalize():
        d = gx_ref[...] - gy_ref[...]
        out_ref[0, 0] = jnp.sum(d * d)


def gram_sq_sum(x2, y2):
    m, k = x2.shape
    m_pad = _round_up(m, _SUBLANE)
    tk, k_pad = _choose_k_tiling(m_pad, k, x2.dtype.itemsize, n_streams=2)
    xp = _pad2d(x2, m_pad, k_pad)
    yp = _pad2d(y2, m_pad, k_pad)

    out = pl.pallas_call(
        _gram_sq_kernel,
        out_shape=jax.ShapeDtypeStruct((1, 1), jnp.float32),
        grid=(k_pad // tk,),
        in_specs=[
            pl.BlockSpec((m_pad, tk), lambda kk: (0, kk)),
            pl.BlockSpec((m_pad, tk), lambda kk: (0, kk)),
        ],
        out_specs=_scalar_smem_out_spec(),
        scratch_shapes=[
            pltpu.VMEM((m_pad, m_pad), jnp.float32),
            pltpu.VMEM((m_pad, m_pad), jnp.float32),
        ],
        compiler_params=_compiler_params(),
    )(xp, yp)
    return out[0, 0]


# ----------------------------------------------------------------------------
# Kernel 2: level-2 fusion — gram-difference squared sum (s vs st) AND
#           content squared-error sum (c vs st) in a single pass over st.
# ----------------------------------------------------------------------------
def _gram_content_kernel(s_ref, st_ref, c_ref, g_out_ref, c_out_ref,
                         gs_ref, gst_ref, cacc_ref):
    k = pl.program_id(0)

    @pl.when(k == 0)
    def _init():
        gs_ref[...] = jnp.zeros_like(gs_ref)
        gst_ref[...] = jnp.zeros_like(gst_ref)
        cacc_ref[0] = jnp.float32(0.0)

    s = s_ref[...]
    st = st_ref[...]
    gs_ref[...] += lax.dot_general(s, s, _DN_LAST, preferred_element_type=jnp.float32)
    gst_ref[...] += lax.dot_general(st, st, _DN_LAST, preferred_element_type=jnp.float32)

    dc = c_ref[...].astype(jnp.float32) - st.astype(jnp.float32)
    cacc_ref[0] += jnp.sum(dc * dc)

    @pl.when(k == pl.num_programs(0) - 1)
    def _finalize():
        dg = gs_ref[...] - gst_ref[...]
        g_out_ref[0, 0] = jnp.sum(dg * dg)
        c_out_ref[0, 0] = cacc_ref[0]


def gram_content_sq_sums(s2, st2, c2):
    m, k = s2.shape
    m_pad = _round_up(m, _SUBLANE)
    tk, k_pad = _choose_k_tiling(m_pad, k, s2.dtype.itemsize, n_streams=3)
    sp = _pad2d(s2, m_pad, k_pad)
    stp = _pad2d(st2, m_pad, k_pad)
    cp = _pad2d(c2, m_pad, k_pad)

    g_out, c_out = pl.pallas_call(
        _gram_content_kernel,
        out_shape=(
            jax.ShapeDtypeStruct((1, 1), jnp.float32),
            jax.ShapeDtypeStruct((1, 1), jnp.float32),
        ),
        grid=(k_pad // tk,),
        in_specs=[
            pl.BlockSpec((m_pad, tk), lambda kk: (0, kk)),
            pl.BlockSpec((m_pad, tk), lambda kk: (0, kk)),
            pl.BlockSpec((m_pad, tk), lambda kk: (0, kk)),
        ],
        out_specs=(
            _scalar_smem_out_spec(),
            _scalar_smem_out_spec(),
        ),
        scratch_shapes=[
            pltpu.VMEM((m_pad, m_pad), jnp.float32),
            pltpu.VMEM((m_pad, m_pad), jnp.float32),
            pltpu.SMEM((1,), jnp.float32),
        ],
        compiler_params=_compiler_params(),
    )(sp, stp, cp)
    return g_out[0, 0], c_out[0, 0]


# ----------------------------------------------------------------------------
# Kernel 3: tiled squared-error sum (fallback content MSE path).
# ----------------------------------------------------------------------------
def _mse_sq_kernel(x_ref, y_ref, out_ref, acc_ref):
    k = pl.program_id(0)

    @pl.when(k == 0)
    def _init():
        acc_ref[0] = jnp.float32(0.0)

    d = x_ref[...].astype(jnp.float32) - y_ref[...].astype(jnp.float32)
    acc_ref[0] += jnp.sum(d * d)

    @pl.when(k == pl.num_programs(0) - 1)
    def _finalize():
        out_ref[0, 0] = acc_ref[0]


def mse_mean(x2, y2):
    m, k = x2.shape
    m_pad = _round_up(m, _SUBLANE)
    tk, k_pad = _choose_k_tiling(m_pad, k, x2.dtype.itemsize, n_streams=2)
    xp = _pad2d(x2, m_pad, k_pad)
    yp = _pad2d(y2, m_pad, k_pad)

    out = pl.pallas_call(
        _mse_sq_kernel,
        out_shape=jax.ShapeDtypeStruct((1, 1), jnp.float32),
        grid=(k_pad // tk,),
        in_specs=[
            pl.BlockSpec((m_pad, tk), lambda kk: (0, kk)),
            pl.BlockSpec((m_pad, tk), lambda kk: (0, kk)),
        ],
        out_specs=_scalar_smem_out_spec(),
        scratch_shapes=[pltpu.SMEM((1,), jnp.float32)],
        compiler_params=_compiler_params(),
    )(xp, yp)
    return out[0, 0] / jnp.float32(m * k)


# ----------------------------------------------------------------------------
# Wrapper reproducing PerceptualLoss.forward
# ----------------------------------------------------------------------------
def perceptual_loss(c_feats, s_feats, st_feats):
    n_levels = len(s_feats)
    s_loss = jnp.float32(0.0)
    c_loss = None

    fuse_content = (
        n_levels > _CONTENT_LEVEL
        and c_feats[_CONTENT_LEVEL].shape == st_feats[_CONTENT_LEVEL].shape
        and s_feats[_CONTENT_LEVEL].shape == st_feats[_CONTENT_LEVEL].shape
    )

    for ix in range(n_levels):
        a, b, c, d = s_feats[ix].shape
        M = a * b
        K = c * d
        if fuse_content and ix == _CONTENT_LEVEL:
            g_raw, c_raw = gram_content_sq_sums(
                _flat2d(s_feats[ix]), _flat2d(st_feats[ix]), _flat2d(c_feats[ix]))
            c_loss = c_raw / jnp.float32(M * K)
        else:
            g_raw = gram_sq_sum(_flat2d(s_feats[ix]), _flat2d(st_feats[ix]))
        # gram(F) = (F F^T) / (M*K); style term = mean over M*M gram entries.
        # Apply scaling once, as successive divides (avoids f32 overflow of (M*K)^2).
        s_loss = s_loss + ((g_raw / jnp.float32(M * K)) / jnp.float32(M * K)) / jnp.float32(M * M)

    if c_loss is None:
        c_loss = mse_mean(_flat2d(c_feats[_CONTENT_LEVEL]), _flat2d(st_feats[_CONTENT_LEVEL]))

    return c_loss + _STYLE_WEIGHT * s_loss


# ----------------------------------------------------------------------------
# Pure-JAX reference (for verification only)
# ----------------------------------------------------------------------------
def _ref_gram(x):
    a, b, c, d = x.shape
    f = x.reshape(a * b, c * d)
    return (f @ f.T) / (a * b * c * d)


def _ref_loss(c_feats, s_feats, st_feats):
    c_loss = jnp.mean((c_feats[2] - st_feats[2]) ** 2)
    s_loss = 0.0
    for ix in range(len(s_feats)):
        s_loss = s_loss + jnp.mean((_ref_gram(s_feats[ix]) - _ref_gram(st_feats[ix])) ** 2)
    return c_loss + _STYLE_WEIGHT * s_loss


if __name__ == "__main__":
    key = jax.random.PRNGKey(0)

    # Three feature levels (NCHW), small shapes. Level 2 drives the content loss.
    level_shapes = [(2, 4, 16, 16), (2, 8, 8, 8), (2, 16, 4, 4)]

    keys = jax.random.split(key, 3 * len(level_shapes))
    c_feats, s_feats, st_feats = [], [], []
    for i, shp in enumerate(level_shapes):
        c_feats.append(jax.random.normal(keys[3 * i + 0], shp, dtype=jnp.float32))
        s_feats.append(jax.random.normal(keys[3 * i + 1], shp, dtype=jnp.float32))
        st_feats.append(jax.random.normal(keys[3 * i + 2], shp, dtype=jnp.float32))

    loss = jax.block_until_ready(perceptual_loss(c_feats, s_feats, st_feats))
    ref = _ref_loss(c_feats, s_feats, st_feats)
    assert jnp.allclose(loss, ref, rtol=1e-4, atol=1e-3), (loss, ref)

    # Also exercise the standalone tiled-MSE fallback path.
    m_val = jax.block_until_ready(mse_mean(_flat2d(c_feats[0]), _flat2d(st_feats[0])))
    m_ref = jnp.mean((c_feats[0] - st_feats[0]) ** 2)
    assert jnp.allclose(m_val, m_ref, rtol=1e-4, atol=1e-4), (m_val, m_ref)

    print("KERNEL_OK")
</pallas_src>

<mosaic_0001>
module attributes {stable_mosaic.version = 11 : i64} {
  func.func @_gram_sq_kernel(%arg0: i32, %arg1: memref<8x256xf32, #tpu.memory_space<vmem>>, %arg2: memref<8x256xf32, #tpu.memory_space<vmem>>, %arg3: memref<1x1xf32, #tpu.memory_space<smem>>, %arg4: memref<8x8xf32, #tpu.memory_space<vmem>>, %arg5: memref<8x8xf32, #tpu.memory_space<vmem>>) attributes {dimension_semantics = [#tpu.dimension_semantics<arbitrary>], iteration_bounds = array<i64: 1>, scalar_prefetch = 0 : i64, scratch_operands = 2 : i64, tpu.core_type = #tpu.core_type<tc>, window_params = [{transform_indices = @transform_0, window_bounds = array<i64: 8, 256>}, {transform_indices = @transform_1, window_bounds = array<i64: 8, 256>}, {transform_indices = @transform_2, window_bounds = array<i64: 1, 1>}]} {
    %c0_i32 = arith.constant 0 : i32
    %0 = arith.cmpi eq, %arg0, %c0_i32 : i32
    %1 = arith.extui %0 : i1 to i32
    %c0_i32_0 = arith.constant 0 : i32
    %2 = arith.cmpi ne, %1, %c0_i32_0 : i32
    scf.if %2 {
      %cst_15 = arith.constant 0.000000e+00 : f32
      %16 = vector.broadcast %cst_15 : f32 to vector<8x8xf32>
      %c0_16 = arith.constant 0 : index
      %c0_17 = arith.constant 0 : index
      %17 = vector.load %arg4[%c0_16, %c0_17] : memref<8x8xf32, #tpu.memory_space<vmem>>, vector<8x8xf32>
      tpu.vector_store %arg4[%c0_16, %c0_17], %16 {strides = array<i32>} : memref<8x8xf32, #tpu.memory_space<vmem>>, vector<8x8xf32>,
      %cst_18 = arith.constant 0.000000e+00 : f32
      %18 = vector.broadcast %cst_18 : f32 to vector<8x8xf32>
      %c0_19 = arith.constant 0 : index
      %c0_20 = arith.constant 0 : index
      %19 = vector.load %arg5[%c0_19, %c0_20] : memref<8x8xf32, #tpu.memory_space<vmem>>, vector<8x8xf32>
      tpu.vector_store %arg5[%c0_19, %c0_20], %18 {strides = array<i32>} : memref<8x8xf32, #tpu.memory_space<vmem>>, vector<8x8xf32>,
    } else {
    }
    %c0 = arith.constant 0 : index
    %c0_1 = arith.constant 0 : index
    %3 = vector.load %arg1[%c0, %c0_1] : memref<8x256xf32, #tpu.memory_space<vmem>>, vector<8x256xf32>
    %c0_2 = arith.constant 0 : index
    %c0_3 = arith.constant 0 : index
    %4 = vector.load %arg2[%c0_2, %c0_3] : memref<8x256xf32, #tpu.memory_space<vmem>>, vector<8x256xf32>
    %c0_4 = arith.constant 0 : index
    %c0_5 = arith.constant 0 : index
    %5 = vector.load %arg4[%c0_4, %c0_5] : memref<8x8xf32, #tpu.memory_space<vmem>>, vector<8x8xf32>
    %cst = arith.constant dense<0.000000e+00> : vector<8x8xf32>
    %6 = tpu.matmul %3, %3, %cst {dimension_numbers = #tpu.dot_dimension_numbers<[1], [1], [0], [0], [0, 0, 1, 0], [], []>} : vector<8x256xf32>, vector<8x256xf32>, vector<8x8xf32> -> vector<8x8xf32>
    %7 = arith.addf %5, %6 : vector<8x8xf32>
    %c0_6 = arith.constant 0 : index
    %c0_7 = arith.constant 0 : index
    %8 = vector.load %arg4[%c0_6, %c0_7] : memref<8x8xf32, #tpu.memory_space<vmem>>, vector<8x8xf32>
    tpu.vector_store %arg4[%c0_6, %c0_7], %7 {strides = array<i32>} : memref<8x8xf32, #tpu.memory_space<vmem>>, vector<8x8xf32>,
    %c0_8 = arith.constant 0 : index
    %c0_9 = arith.constant 0 : index
    %9 = vector.load %arg5[%c0_8, %c0_9] : memref<8x8xf32, #tpu.memory_space<vmem>>, vector<8x8xf32>
    %cst_10 = arith.constant dense<0.000000e+00> : vector<8x8xf32>
    %10 = tpu.matmul %4, %4, %cst_10 {dimension_numbers = #tpu.dot_dimension_numbers<[1], [1], [0], [0], [0, 0, 1, 0], [], []>} : vector<8x256xf32>, vector<8x256xf32>, vector<8x8xf32> -> vector<8x8xf32>
    %11 = arith.addf %9, %10 : vector<8x8xf32>
    %c0_11 = arith.constant 0 : index
    %c0_12 = arith.constant 0 : index
    %12 = vector.load %arg5[%c0_11, %c0_12] : memref<8x8xf32, #tpu.memory_space<vmem>>, vector<8x8xf32>
    tpu.vector_store %arg5[%c0_11, %c0_12], %11 {strides = array<i32>} : memref<8x8xf32, #tpu.memory_space<vmem>>, vector<8x8xf32>,
    %c0_i32_13 = arith.constant 0 : i32
    %13 = arith.cmpi eq, %arg0, %c0_i32_13 : i32
    %14 = arith.extui %13 : i1 to i32
    %c0_i32_14 = arith.constant 0 : i32
    %15 = arith.cmpi ne, %14, %c0_i32_14 : i32
    scf.if %15 {
      %c0_15 = arith.constant 0 : index
      %c0_16 = arith.constant 0 : index
      %16 = vector.load %arg4[%c0_15, %c0_16] : memref<8x8xf32, #tpu.memory_space<vmem>>, vector<8x8xf32>
      %c0_17 = arith.constant 0 : index
      %c0_18 = arith.constant 0 : index
      %17 = vector.load %arg5[%c0_17, %c0_18] : memref<8x8xf32, #tpu.memory_space<vmem>>, vector<8x8xf32>
      %18 = arith.subf %16, %17 : vector<8x8xf32>
      %19 = arith.mulf %18, %18 : vector<8x8xf32>
      %20 = vector.shape_cast %19 : vector<8x8xf32> to vector<1x8x8xf32>
      %cst_19 = arith.constant dense<0.000000e+00> : vector<1xf32>
      %21 = vector.multi_reduction <add>, %20, %cst_19 [1, 2] : vector<1x8x8xf32> to vector<1xf32>
      %22 = vector.shape_cast %21 : vector<1xf32> to vector<1x1x1xf32>
      %23 = vector.extract %22[0, 0, 0] : f32 from vector<1x1x1xf32>
      %c0_20 = arith.constant 0 : index
      %c0_21 = arith.constant 0 : index
      %24 = memref.load %arg3[%c0_20, %c0_21] : memref<1x1xf32, #tpu.memory_space<smem>>
      memref.store %23, %arg3[%c0_20, %c0_21] : memref<1x1xf32, #tpu.memory_space<smem>>
    } else {
    }
    return
  }
  func.func @transform_0(%arg0: i32) -> (i32, i32) {
    %c0_i32 = arith.constant 0 : i32
    %c0_i32_0 = arith.constant 0 : i32
    return %c0_i32, %arg0 : i32, i32
  }
  func.func @transform_1(%arg0: i32) -> (i32, i32) {
    %c0_i32 = arith.constant 0 : i32
    %c0_i32_0 = arith.constant 0 : i32
    return %c0_i32, %arg0 : i32, i32
  }
  func.func @transform_2(%arg0: i32) -> (i32, i32) {
    %c0_i32 = arith.constant 0 : i32
    %c0_i32_0 = arith.constant 0 : i32
    %c0_i32_1 = arith.constant 0 : i32
    return %c0_i32, %c0_i32_0 : i32, i32
  }
}

</mosaic_0001>

<llo_original>
// kernel: tpu_custom_call.1
$region0: #{tpu_custom_call.1}
  #allocation0 [shape = 'u32[]', space=smem, size = 0x4, offset = 0x4, fixed_abs, tag = 'smem constant byte address 0x4 - core index']
  #allocation1 [shape = 'u32[144,128]{1,0:T(1,128)}', space=vmem, size = 0x12000, scoped, tag = 'internal scratch']
  #allocation2 [shape = 'f32[8,8]{1,0:T(8,128)}', space=vmem, size = 0x1000, scoped, tag = 'scratch operand']
  #allocation3 [shape = 'f32[8,8]{1,0:T(8,128)}', space=vmem, size = 0x1000, scoped, tag = 'scratch operand']
  %s0 = inlined_call_operand.hbm [shape: f32[8,256], index: 0, kind: input, shape index: {}]
  %s1 = inlined_call_operand.hbm [shape: f32[8,256], index: 1, kind: input, shape index: {}]
  %s2 = inlined_call_operand.hbm [shape: f32[1,1], index: 2, kind: output, shape index: {}]
  %s3 = sld [smem:[#allocation0]]
  $region34: #{tpu_custom_call.1} parent=0
    _
  %s5 = ssub.s32 1, %s3
  %s6 = scalar_select 0, %s5, %s3
  $region1: #{tpu_custom_call.1} parent=0
    #allocation4 [shape = 'u8[8192]{0}', space=vmem, size = 0x2000, scoped, tag = 'input window, operand 0, single buffered']
    #allocation5 [shape = 's32[1]{0}', space=sflag, size = 0x4, scoped, tag = 'scoped memory for tpu_custom_call.1']
    #allocation6 [shape = 's32[1]{0}', space=sflag, size = 0x4, scoped, tag = 'scoped memory for tpu_custom_call.1']
    #allocation7 [shape = 'u8[8192]{0}', space=vmem, size = 0x2000, scoped, tag = 'input window, operand 1, single buffered']
    #allocation8 [shape = 's32[1]{0}', space=sflag, size = 0x4, scoped, tag = 'scoped memory for tpu_custom_call.1']
    #allocation9 [shape = 'u8[512]{0}', space=smem, size = 0x200, scoped, tag = 'output window, operand 0, single buffered']
    %7 = vsyncpa [#allocation5], 0
    %8 = vsyncpa [#allocation8], 0
    %9 = vsyncpa [#allocation6], 0
    // Predicated region
    $region2: #{tpu_custom_call.1} parent=1 // pred_check
      _
    $region3: #{tpu_custom_call.1} parent=1 // pred_check_branch
      %11 = sbr.rel (0) target = $region5
    $region4: #{tpu_custom_call.1} parent=1 // pred_region
      %s13 = ssub.s32 256, 256
      %14 = vsyncadd [#allocation5], %s13
      %s16 = sshll.u32 [#allocation4], 4
      %s17 = int_to_ptr.vmem [resolvable:$true] %s16
      %19 = dma.hbm_to_vmem [thread:$0]  %s0, 256, %s17, [#allocation5]
    $region5: #{tpu_custom_call.1} parent=1 // pred_fallthru
      _
    // Predicated region
    $region6: #{tpu_custom_call.1} parent=1 // pred_check
      _
    $region7: #{tpu_custom_call.1} parent=1 // pred_check_branch
      %21 = sbr.rel (0) target = $region9
    $region8: #{tpu_custom_call.1} parent=1 // pred_region
      %s23 = ssub.s32 256, 256
      %24 = vsyncadd [#allocation8], %s23
      %s26 = sshll.u32 [#allocation7], 4
      %s27 = int_to_ptr.vmem [resolvable:$true] %s26
      %29 = dma.hbm_to_vmem [thread:$0]  %s1, 256, %s27, [#allocation8]
    $region9: #{tpu_custom_call.1} parent=1 // pred_fallthru
      _
    // Predicated region
    $region10: #{tpu_custom_call.1} parent=1 // pred_check
      _
    $region11: #{tpu_custom_call.1} parent=1 // pred_check_branch
      %31 = sbr.rel (0) target = $region13
    $region12: #{tpu_custom_call.1} parent=1 // pred_region
      %32 = dma.done [#allocation5], 256
    $region13: #{tpu_custom_call.1} parent=1 // pred_fallthru
      _
    // Predicated region
    $region14: #{tpu_custom_call.1} parent=1 // pred_check
      _
    $region15: #{tpu_custom_call.1} parent=1 // pred_check_branch
      %34 = sbr.rel (0) target = $region17
    $region16: #{tpu_custom_call.1} parent=1 // pred_region
      %35 = dma.done [#allocation8], 256
    $region17: #{tpu_custom_call.1} parent=1 // pred_fallthru
      _
    %p36 = scmp.eq.s32.totalorder 0, 0
    // Predicated region
    $region18: #{tpu_custom_call.1} parent=1 // pred_check
      %p37 = pneg %p36
    $region19: #{tpu_custom_call.1} parent=1 // pred_check_branch
      %39 = sbr.rel (%p37) target = $region21
    $region20: #{tpu_custom_call.1} parent=1 // pred_region
      %vm40 = vcmask 64512
      %41 = vst.msk [vmem:[#allocation2] sm:$0xff] %vm40, 0.0
      %42 = vst.msk [vmem:[#allocation3] sm:$0xff] %vm40, 0.0
    $region21: #{tpu_custom_call.1} parent=1 // pred_fallthru
      _
    %v43 = vld [vmem:[#allocation4] sm:$0xff]
    %v44 = vld [vmem:[#allocation4 + $0x8] sm:$0xff]
    %v45 = vld [vmem:[#allocation7] sm:$0xff]
    %v46 = vld [vmem:[#allocation7 + $0x8] sm:$0xff]
    %v47 = vld [vmem:[#allocation2] sm:$0xff]
    %48 = vmatprep.subr.mxu0 0.0
    %49 = vmatpush1.xpose.msra.mxu0 0.0
    %50 = vmatprep.subr.mxu0 0.0
    %51 = vmatpush1.xpose.msra.mxu0 0.0
    %52 = vmatprep.subr.mxu0 0.0
    %53 = vmatpush1.xpose.msra.mxu0 0.0
    %54 = vmatprep.subr.mxu0 0.0
    %55 = vmatpush1.xpose.msra.mxu0 0.0
    %56 = vmatprep.subr.mxu0 0.0
    %57 = vmatpush1.xpose.msra.mxu0 0.0
    %58 = vmatprep.subr.mxu0 0.0
    %59 = vmatpush1.xpose.msra.mxu0 0.0
    %60 = vmatprep.subr.mxu0 0.0
    %61 = vmatpush1.xpose.msra.mxu0 0.0
    %62 = vmatprep.subr.mxu0 0.0
    %63 = vmatpush1.xpose.msra.mxu0 0.0
    %64 = vmatprep.subr.mxu0 0.0
    %65 = vmatpush1.xpose.msra.mxu0 0.0
    %66 = vmatprep.subr.mxu0 0.0
    %67 = vmatpush1.xpose.msra.mxu0 0.0
    %68 = vmatprep.subr.mxu0 0.0
    %69 = vmatpush1.xpose.msra.mxu0 0.0
    %70 = vmatprep.subr.mxu0 0.0
    %71 = vmatpush1.xpose.msra.mxu0 0.0
    %72 = vmatprep.subr.mxu0 0.0
    %73 = vmatpush1.xpose.msra.mxu0 0.0
    %74 = vmatprep.subr.mxu0 0.0
    %75 = vmatpush1.xpose.msra.mxu0 0.0
    %76 = vmatprep.subr.mxu0 0.0
    %77 = vmatpush1.xpose.msra.mxu0 0.0
    %78 = vmatprep.subr.mxu0 %v44
    %79 = vmatpush1.xpose.msra.mxu0 %v43
    %80 = vmatprep.subr.mxu0 0.0
    %81 = vmatpush2.xpose.msra.mxu0 0.0
    %82 = vmatprep.subr.mxu0 0.0
    %83 = vmatpush2.xpose.msra.mxu0 0.0
    %84 = vmatprep.subr.mxu0 0.0
    %85 = vmatpush2.xpose.msra.mxu0 0.0
    %86 = vmatprep.subr.mxu0 0.0
    %87 = vmatpush2.xpose.msra.mxu0 0.0
    %88 = vmatprep.subr.mxu0 0.0
    %89 = vmatpush2.xpose.msra.mxu0 0.0
    %90 = vmatprep.subr.mxu0 0.0
    %91 = vmatpush2.xpose.msra.mxu0 0.0
    %92 = vmatprep.subr.mxu0 0.0
    %93 = vmatpush2.xpose.msra.mxu0 0.0
    %94 = vmatprep.subr.mxu0 0.0
    %95 = vmatpush2.xpose.msra.mxu0 0.0
    %96 = vmatprep.subr.mxu0 0.0
    %97 = vmatpush2.xpose.msra.mxu0 0.0
    %98 = vmatprep.subr.mxu0 0.0
    %99 = vmatpush2.xpose.msra.mxu0 0.0
    %100 = vmatprep.subr.mxu0 0.0
    %101 = vmatpush2.xpose.msra.mxu0 0.0
    %102 = vmatprep.subr.mxu0 0.0
    %103 = vmatpush2.xpose.msra.mxu0 0.0
    %104 = vmatprep.subr.mxu0 0.0
    %105 = vmatpush2.xpose.msra.mxu0 0.0
    %106 = vmatprep.subr.mxu0 0.0
    %107 = vmatpush2.xpose.msra.mxu0 0.0
    %108 = vmatprep.subr.mxu0 0.0
    %109 = vmatpush2.xpose.msra.mxu0 0.0
    %110 = vmatprep.subr.mxu0 0.0
    %111 = vmatpush2.xpose.msra.mxu0 0.0
    %112 = vmatprep.mubr.f32.mxu0 %v44
    %113 = vmatmul.mubr.f32.gmra.mxu0 %v43
    %v114 = vpop.f32.mrf.mxu0
    %v115 = vadd.f32 0.0, %v114
    %v116 = vpop.f32.mrf.mxu0
    %117 = vdwg.mxu0
    %v118 = vadd.f32 %v47, %v115
    %vm119 = vcmask 64512
    %120 = vst.msk [vmem:[#allocation2] sm:$0xff] %vm119, %v118
    %v121 = vld [vmem:[#allocation3] sm:$0xff]
    %122 = vmatprep.subr.mxu0 0.0
    %123 = vmatpush1.xpose.msra.mxu0 0.0
    %124 = vmatprep.subr.mxu0 0.0
    %125 = vmatpush1.xpose.msra.mxu0 0.0
    %126 = vmatprep.subr.mxu0 0.0
    %127 = vmatpush1.xpose.msra.mxu0 0.0
    %128 = vmatprep.subr.mxu0 0.0
    %129 = vmatpush1.xpose.msra.mxu0 0.0
    %130 = vmatprep.subr.mxu0 0.0
    %131 = vmatpush1.xpose.msra.mxu0 0.0
    %132 = vmatprep.subr.mxu0 0.0
    %133 = vmatpush1.xpose.msra.mxu0 0.0
    %134 = vmatprep.subr.mxu0 0.0
    %135 = vmatpush1.xpose.msra.mxu0 0.0
    %136 = vmatprep.subr.mxu0 0.0
    %137 = vmatpush1.xpose.msra.mxu0 0.0
    %138 = vmatprep.subr.mxu0 0.0
    %139 = vmatpush1.xpose.msra.mxu0 0.0
    %140 = vmatprep.subr.mxu0 0.0
    %141 = vmatpush1.xpose.msra.mxu0 0.0
    %142 = vmatprep.subr.mxu0 0.0
    %143 = vmatpush1.xpose.msra.mxu0 0.0
    %144 = vmatprep.subr.mxu0 0.0
    %145 = vmatpush1.xpose.msra.mxu0 0.0
    %146 = vmatprep.subr.mxu0 0.0
    %147 = vmatpush1.xpose.msra.mxu0 0.0
    %148 = vmatprep.subr.mxu0 0.0
    %149 = vmatpush1.xpose.msra.mxu0 0.0
    %150 = vmatprep.subr.mxu0 0.0
    %151 = vmatpush1.xpose.msra.mxu0 0.0
    %152 = vmatprep.subr.mxu0 %v46
    %153 = vmatpush1.xpose.msra.mxu0 %v45
    %154 = vmatprep.subr.mxu0 0.0
    %155 = vmatpush2.xpose.msra.mxu0 0.0
    %156 = vmatprep.subr.mxu0 0.0
    %157 = vmatpush2.xpose.msra.mxu0 0.0
    %158 = vmatprep.subr.mxu0 0.0
    %159 = vmatpush2.xpose.msra.mxu0 0.0
    %160 = vmatprep.subr.mxu0 0.0
    %161 = vmatpush2.xpose.msra.mxu0 0.0
    %162 = vmatprep.subr.mxu0 0.0
    %163 = vmatpush2.xpose.msra.mxu0 0.0
    %164 = vmatprep.subr.mxu0 0.0
    %165 = vmatpush2.xpose.msra.mxu0 0.0
    %166 = vmatprep.subr.mxu0 0.0
    %167 = vmatpush2.xpose.msra.mxu0 0.0
    %168 = vmatprep.subr.mxu0 0.0
    %169 = vmatpush2.xpose.msra.mxu0 0.0
    %170 = vmatprep.subr.mxu0 0.0
    %171 = vmatpush2.xpose.msra.mxu0 0.0
    %172 = vmatprep.subr.mxu0 0.0
    %173 = vmatpush2.xpose.msra.mxu0 0.0
    %174 = vmatprep.subr.mxu0 0.0
    %175 = vmatpush2.xpose.msra.mxu0 0.0
    %176 = vmatprep.subr.mxu0 0.0
    %177 = vmatpush2.xpose.msra.mxu0 0.0
    %178 = vmatprep.subr.mxu0 0.0
    %179 = vmatpush2.xpose.msra.mxu0 0.0
    %180 = vmatprep.subr.mxu0 0.0
    %181 = vmatpush2.xpose.msra.mxu0 0.0
    %182 = vmatprep.subr.mxu0 0.0
    %183 = vmatpush2.xpose.msra.mxu0 0.0
    %184 = vmatprep.subr.mxu0 0.0
    %185 = vmatpush2.xpose.msra.mxu0 0.0
    %186 = vmatprep.mubr.f32.mxu0 %v46
    %187 = vmatmul.mubr.f32.gmra.mxu0 %v45
    %v188 = vpop.f32.mrf.mxu0
    %v189 = vadd.f32 0.0, %v188
    %v190 = vpop.f32.mrf.mxu0
    %191 = vdwg.mxu0
    %v192 = vadd.f32 %v121, %v189
    %193 = vst.msk [vmem:[#allocation3] sm:$0xff] %vm119, %v192
    // Predicated region
    $region22: #{tpu_custom_call.1} parent=1 // pred_check
      %p194 = pneg %p36
    $region23: #{tpu_custom_call.1} parent=1 // pred_check_branch
      %196 = sbr.rel (%p194) target = $region25
    $region24: #{tpu_custom_call.1} parent=1 // pred_region
      %v197 = vld [vmem:[#allocation2] sm:$0xff]
      %v198 = vld [vmem:[#allocation3] sm:$0xff]
      %v199 = vsub.f32 %v197, %v198
      %v200 = vmul.f32 %v199, %v199
      %v201 = vsel %vm119, %v200, 0.0
      %202 = vadd.xlane.f32.xlu0 %v201
      %v203 = vpop.xlane.xlu0 %202
      %v204 = vrot.slane %v203, 4
      %v205 = vadd.f32 %v203, %v204
      %v206 = vrot.slane %v205, 2
      %v207 = vadd.f32 %v205, %v206
      %v208 = vrot.slane %v207, 1
      %v209 = vadd.f32 %v207, %v208
      %s210 = vtos %v209
      %s211 = scalar_lea.smem [#allocation9], 0
      %212 = sst [smem:[%s211]] %s210
    $region25: #{tpu_custom_call.1} parent=1 // pred_fallthru
      _
    // Predicated region
    $region26: #{tpu_custom_call.1} parent=1 // pred_check
      _
    $region27: #{tpu_custom_call.1} parent=1 // pred_check_branch
      %214 = sbr.rel (0) target = $region29
    $region28: #{tpu_custom_call.1} parent=1 // pred_region
      %s216 = ssub.s32 16, 16
      %217 = vsyncadd [#allocation6], %s216
      %220 = dma.smem_to_hbm [#allocation9], 16, %s2, [#allocation6]
    $region29: #{tpu_custom_call.1} parent=1 // pred_fallthru
      _
    // Predicated region
    $region30: #{tpu_custom_call.1} parent=1 // pred_check
      _
    $region31: #{tpu_custom_call.1} parent=1 // pred_check_branch
      %222 = sbr.rel (0) target = $region33
    $region32: #{tpu_custom_call.1} parent=1 // pred_region
      %223 = dma.done [#allocation6], 16
    $region33: #{tpu_custom_call.1} parent=1 // pred_fallthru
      _
    %224 = sfence
    %225 = vsyncpa [#allocation5], 1
    %226 = vsyncpa [#allocation8], 1
    %227 = vsyncpa [#allocation6], 1

</llo_original>
